<compile_context>
chip_gen: v6e
topology: v6e:2x2x1
jax: 0.10.0
libtpu: 0.0.40
codegen_flags: <defaults>
</compile_context>

<pallas_src>
import functools

import jax
import jax.numpy as jnp
import numpy as np
from jax import lax
from jax.experimental import pallas as pl
from jax.experimental.pallas import tpu as pltpu

NUM_EPOCHS = 3
CANNY_GOODLOSS_WEIGHT = 0.5
CANNY_SMOOTHENING = [80, 5]


def odd(x):
    return int(x // 2) * 2 + 1


# --------------------------------------------------------------------------
# BerHu helpers: lane-dense flattening (last dim = 128 lanes), zero padded.
# Zero padding is harmless: padded elements contribute |0 - 0| = 0 to both the
# max pass and the BerHu sum; the mean divides by the true element count.
# --------------------------------------------------------------------------
def _choose_tile_rows(num_elems):
    rows = -(-num_elems // 128)
    if rows >= 256:
        return 256
    return ((rows + 7) // 8) * 8


def _flatten_lane_dense(x, tile_rows):
    x = x.astype(jnp.float32).reshape(-1)
    n = x.shape[0]
    rows = -(-n // 128)
    rows = ((rows + tile_rows - 1) // tile_rows) * tile_rows
    pad = rows * 128 - n
    if pad:
        x = jnp.concatenate([x, jnp.zeros((pad,), jnp.float32)])
    return x.reshape(rows, 128)


# ----------------------- pass 1: global max of |pred - target| -------------
def _absmax_kernel(p_ref, t_ref, o_ref, acc_ref):
    m = jnp.max(jnp.abs(p_ref[...] - t_ref[...]))

    @pl.when(pl.program_id(0) == 0)
    def _():
        acc_ref[...] = jnp.zeros_like(acc_ref)

    acc_ref[...] = jnp.maximum(acc_ref[...], m)

    @pl.when(pl.program_id(0) == pl.num_programs(0) - 1)
    def _():
        o_ref[...] = acc_ref[...]


def _absmax_from_tiles(p2, t2, tile_rows):
    rows = p2.shape[0]
    out = pl.pallas_call(
        _absmax_kernel,
        out_shape=jax.ShapeDtypeStruct((1, 1), jnp.float32),
        grid=(rows // tile_rows,),
        in_specs=[pl.BlockSpec((tile_rows, 128), lambda i: (i, 0)),
                  pl.BlockSpec((tile_rows, 128), lambda i: (i, 0))],
        out_specs=pl.BlockSpec((1, 1), lambda i: (0, 0)),
        scratch_shapes=[pltpu.VMEM((1, 1), jnp.float32)],
        compiler_params=pltpu.CompilerParams(dimension_semantics=("arbitrary",)),
    )(p2, t2)
    return out[0, 0]


def _absmax_pallas(pred, target):
    num = int(np.prod(pred.shape))
    tile_rows = _choose_tile_rows(num)
    return _absmax_from_tiles(_flatten_lane_dense(pred, tile_rows),
                              _flatten_lane_dense(target, tile_rows),
                              tile_rows)


# ---------- standalone BerHu sum (used when the canny regularizer is off) ---
def _berhu_sum_kernel(c_ref, p_ref, t_ref, o_ref, acc_ref):
    c = c_ref[0]
    d = p_ref[...] - t_ref[...]
    ad = jnp.abs(d)
    denom = jnp.where(c > 0.0, 2.0 * c, 1.0)       # guard c == 0 (branch unused then)
    val = jnp.where(ad <= c, ad, (d * d + c * c) / denom)
    s = jnp.sum(val)

    @pl.when(pl.program_id(0) == 0)
    def _():
        acc_ref[...] = jnp.zeros_like(acc_ref)

    acc_ref[...] = acc_ref[...] + s

    @pl.when(pl.program_id(0) == pl.num_programs(0) - 1)
    def _():
        o_ref[...] = acc_ref[...]


def berhu_loss_pallas(pred, target):
    num = int(np.prod(pred.shape))
    tile_rows = _choose_tile_rows(num)
    p2 = _flatten_lane_dense(pred, tile_rows)
    t2 = _flatten_lane_dense(target, tile_rows)
    c = (0.2 * _absmax_from_tiles(p2, t2, tile_rows)).reshape(1).astype(jnp.float32)
    rows = p2.shape[0]
    out = pl.pallas_call(
        _berhu_sum_kernel,
        out_shape=jax.ShapeDtypeStruct((1, 1), jnp.float32),
        grid=(rows // tile_rows,),
        in_specs=[pl.BlockSpec(memory_space=pltpu.MemorySpace.SMEM),
                  pl.BlockSpec((tile_rows, 128), lambda i: (i, 0)),
                  pl.BlockSpec((tile_rows, 128), lambda i: (i, 0))],
        out_specs=pl.BlockSpec((1, 1), lambda i: (0, 0)),
        scratch_shapes=[pltpu.VMEM((1, 1), jnp.float32)],
        compiler_params=pltpu.CompilerParams(dimension_semantics=("arbitrary",)),
    )(c, p2, t2)
    return out[0, 0] / float(num)


# --------------------------------------------------------------------------
# Constant 1-D operator matrices (host-side numpy) so that every pool / conv
# in the fused kernel becomes a pair of small MXU matmuls:
#   rowm (5,H,H) applied on the left, colm (5,W,W) applied on the right.
#   [0] clamp-shift to previous index   [1] clamp-shift to next index
#   [2] box band (|i-k| <= G//2)        [3]/[4] Sobel smooth/diff (with
#   replication-pad folded into the border rows).
# --------------------------------------------------------------------------
def _conv_matrices(h, w, gauss_size):
    pg = gauss_size // 2

    def band(n):
        i = np.arange(n)[:, None]
        k = np.arange(n)[None, :]
        return (np.abs(i - k) <= pg).astype(np.float32)

    def shift_prev(n):        # out[i] = x[max(i-1, 0)]
        m = np.zeros((n, n), np.float32)
        m[np.arange(n), np.maximum(np.arange(n) - 1, 0)] = 1.0
        return m

    def shift_next(n):        # out[i] = x[min(i+1, n-1)]
        m = np.zeros((n, n), np.float32)
        m[np.arange(n), np.minimum(np.arange(n) + 1, n - 1)] = 1.0
        return m

    def sobel_smooth(n):      # out[i] = x[clip(i-1)] + 2*x[i] + x[clip(i+1)]
        return shift_prev(n) + 2.0 * np.eye(n, dtype=np.float32) + shift_next(n)

    def sobel_diff(n):        # out[i] = x[clip(i+1)] - x[clip(i-1)]
        return shift_next(n) - shift_prev(n)

    rowm = np.stack([shift_prev(h), shift_next(h), band(h),
                     sobel_smooth(h), sobel_diff(h)])               # left-multiply
    colm = np.stack([shift_prev(w).T, shift_next(w).T, band(w).T,
                     sobel_diff(w).T, sobel_smooth(w).T])           # right-multiply
    return jnp.asarray(rowm), jnp.asarray(colm)


# ------------- fused per-image kernel: BerHu sum + canny gradient loss ------
def _fused_loss_kernel(c_ref, p_ref, t_ref, cn_ref, rowm_ref, colm_ref, out_ref,
                       *, inv_gg):
    x = p_ref[0]          # (H, W)
    t = t_ref[0]
    cn = cn_ref[0]

    def mm(a, b):
        return jnp.dot(a, b, preferred_element_type=jnp.float32)

    # ---- BerHu partial sum (global threshold c streamed via SMEM) ----
    c = c_ref[0]
    d = x - t
    ad = jnp.abs(d)
    denom = jnp.where(c > 0.0, 2.0 * c, 1.0)
    berhu_sum = jnp.sum(jnp.where(ad <= c, ad, (d * d + c * c) / denom))

    # ---- thickened canny: 3x3 max-pool, stride 1, pad 1 (-inf pad == clamp) ----
    up = mm(rowm_ref[0], cn)          # cn[max(i-1,0), j]
    dn = mm(rowm_ref[1], cn)          # cn[min(i+1,H-1), j]
    vmax = jnp.maximum(jnp.maximum(cn, up), dn)
    lf = mm(vmax, colm_ref[0])        # vmax[i, max(j-1,0)]
    rt = mm(vmax, colm_ref[1])        # vmax[i, min(j+1,W-1)]
    thick = jnp.maximum(jnp.maximum(vmax, lf), rt)

    # ---- smoothened canny: GxG box avg (zero pad, count_include_pad) ----
    smooth = mm(mm(rowm_ref[2], thick), colm_ref[2]) * inv_gg

    # ---- Sobel gradients with replication padding (separable matmuls) ----
    gx = mm(mm(rowm_ref[3], x), colm_ref[3])
    gy = mm(mm(rowm_ref[4], x), colm_ref[4])

    w = 1.0 - smooth
    loss_sum = jnp.sum((jnp.abs(gx) + jnp.abs(gy)) * w)
    good_sum = jnp.sum(jnp.abs(gx * smooth) + jnp.abs(gy * smooth))

    # single lane-aligned (1,8,128) partial-sum block per image
    ridx = lax.broadcasted_iota(jnp.int32, out_ref.shape, 1)
    out_ref[...] = jnp.where(ridx == 0, berhu_sum,
                    jnp.where(ridx == 1, loss_sum,
                     jnp.where(ridx == 2, good_sum, 0.0)))


def combined_losses_pallas(pred, target, canny, gauss_size):
    if gauss_size < 3 or gauss_size % 2 != 1:
        raise ValueError(f'Invalid gauss_size: {gauss_size}. '
                         'It must be an odd integer >= 3.')
    b, ch, h, w = pred.shape
    n = b * ch
    p = pred.astype(jnp.float32).reshape(n, h, w)
    t = target.astype(jnp.float32).reshape(n, h, w)
    cn = canny.astype(jnp.float32).reshape(n, h, w)

    # pass 1: global BerHu threshold c = 0.2 * max|pred - target|
    c = (0.2 * _absmax_pallas(pred, target)).reshape(1).astype(jnp.float32)
    rowm, colm = _conv_matrices(h, w, gauss_size)

    kernel = functools.partial(_fused_loss_kernel,
                               inv_gg=1.0 / float(gauss_size * gauss_size))
    out = pl.pallas_call(
        kernel,
        out_shape=jax.ShapeDtypeStruct((n, 8, 128), jnp.float32),
        grid=(n,),
        in_specs=[
            pl.BlockSpec(memory_space=pltpu.MemorySpace.SMEM),       # c (1,)
            pl.BlockSpec((1, h, w), lambda i: (i, 0, 0)),            # pred
            pl.BlockSpec((1, h, w), lambda i: (i, 0, 0)),            # target
            pl.BlockSpec((1, h, w), lambda i: (i, 0, 0)),            # canny
            pl.BlockSpec((5, h, h), lambda i: (0, 0, 0)),            # row mats (resident)
            pl.BlockSpec((5, w, w), lambda i: (0, 0, 0)),            # col mats (resident)
        ],
        out_specs=pl.BlockSpec((1, 8, 128), lambda i: (i, 0, 0)),
        compiler_params=pltpu.CompilerParams(dimension_semantics=("parallel",)),
    )(c, p, t, cn, rowm, colm)

    total_elems = float(n * h * w)
    recon = jnp.sum(out[:, 0, 0]) / total_elems
    edge = (jnp.sum(out[:, 1, 0]) / total_elems
            + CANNY_GOODLOSS_WEIGHT * (2.0 - jnp.sum(out[:, 2, 0]) / total_elems))
    return recon, edge


# --------------------------- CombinedLoss wrapper ---------------------------
class CombinedLoss:
    def __init__(self, canny_reg_weight=1.0, use_canny_regularizer=False):
        self.canny_reg_weight = canny_reg_weight
        self.use_canny_regularizer = use_canny_regularizer

    def __call__(self, predictions, targets, canny_edges=None,
                 current_iter=NUM_EPOCHS):
        if (self.use_canny_regularizer and canny_edges is not None
                and self.canny_reg_weight > 0):
            factor = min(1, current_iter / NUM_EPOCHS)
            gauss_size = odd(factor * CANNY_SMOOTHENING[1]
                             + (1 - factor) * CANNY_SMOOTHENING[0])
            recon, edge = combined_losses_pallas(predictions, targets,
                                                 canny_edges, gauss_size)
            total = recon + self.canny_reg_weight * edge
            return total, recon, edge
        recon = berhu_loss_pallas(predictions, targets)
        edge = jnp.float32(0.0)
        return recon, recon, edge


# --------------------------- pure-JAX references ---------------------------
def _berhu_ref(pred, target):
    diff = pred - target
    ad = jnp.abs(diff)
    c = 0.2 * jnp.max(ad)
    l2 = (diff * diff + c * c) / (2.0 * c)
    return jnp.mean(jnp.where(ad <= c, ad, l2))


def _gradient_loss_ref(pred, canny, gauss_size):
    g, pg = gauss_size, gauss_size // 2
    thick = lax.reduce_window(canny, -jnp.inf, lax.max, (1, 1, 3, 3),
                              (1, 1, 1, 1), [(0, 0), (0, 0), (1, 1), (1, 1)])
    ssum = lax.reduce_window(thick, 0.0, lax.add, (1, 1, g, g),
                             (1, 1, 1, 1), [(0, 0), (0, 0), (pg, pg), (pg, pg)])
    smooth = ssum / float(g * g)
    pp = jnp.pad(pred, ((0, 0), (0, 0), (1, 1), (1, 1)), mode='edge')
    kx = jnp.array([[-1, 0, 1], [-2, 0, 2], [-1, 0, 1]], jnp.float32).reshape(1, 1, 3, 3)
    ky = jnp.array([[-1, -2, -1], [0, 0, 0], [1, 2, 1]], jnp.float32).reshape(1, 1, 3, 3)
    dn = lax.conv_dimension_numbers(pp.shape, kx.shape, ('NCHW', 'OIHW', 'NCHW'))
    gx = lax.conv_general_dilated(pp, kx, (1, 1), 'VALID', dimension_numbers=dn)
    gy = lax.conv_general_dilated(pp, ky, (1, 1), 'VALID', dimension_numbers=dn)
    w = 1.0 - smooth
    loss = jnp.mean(jnp.abs(gx) * w) + jnp.mean(jnp.abs(gy) * w)
    good = jnp.mean(1.0 - jnp.abs(gx * (1.0 - w))) + jnp.mean(1.0 - jnp.abs(gy * (1.0 - w)))
    return loss + CANNY_GOODLOSS_WEIGHT * good


if __name__ == "__main__":
    key = jax.random.PRNGKey(0)
    k1, k2, k3 = jax.random.split(key, 3)
    B, C, H, W = 2, 1, 16, 16
    predictions = jax.random.uniform(k1, (B, C, H, W), jnp.float32, 0.0, 10.0)
    targets = jax.random.uniform(k2, (B, C, H, W), jnp.float32, 0.0, 10.0)
    canny_edges = jax.random.bernoulli(k3, 0.2, (B, C, H, W)).astype(jnp.float32)

    # canny-regularized path (fused kernel)
    loss_fn = CombinedLoss(canny_reg_weight=1.0, use_canny_regularizer=True)
    total, recon, edge = loss_fn(predictions, targets, canny_edges,
                                 current_iter=NUM_EPOCHS)
    total, recon, edge = jax.block_until_ready((total, recon, edge))

    recon_ref = _berhu_ref(predictions, targets)
    edge_ref = _gradient_loss_ref(predictions, canny_edges, 5)
    total_ref = recon_ref + 1.0 * edge_ref
    np.testing.assert_allclose(np.array(recon), np.array(recon_ref), rtol=1e-4, atol=1e-4)
    # slightly looser: kernel uses MXU matmuls for the box/Sobel filters
    np.testing.assert_allclose(np.array(edge), np.array(edge_ref), rtol=5e-3, atol=5e-3)
    np.testing.assert_allclose(np.array(total), np.array(total_ref), rtol=5e-3, atol=5e-3)

    # plain BerHu path (no canny regularizer)
    loss_fn2 = CombinedLoss(use_canny_regularizer=False)
    total2, recon2, edge2 = jax.block_until_ready(loss_fn2(predictions, targets))
    np.testing.assert_allclose(np.array(recon2), np.array(recon_ref), rtol=1e-4, atol=1e-4)
    np.testing.assert_allclose(np.array(edge2), 0.0, atol=1e-7)

    print("KERNEL_OK")
</pallas_src>

<mosaic_0001>
module attributes {stable_mosaic.version = 11 : i64} {
  func.func @_absmax_kernel(%arg0: i32, %arg1: memref<8x128xf32, #tpu.memory_space<vmem>>, %arg2: memref<8x128xf32, #tpu.memory_space<vmem>>, %arg3: memref<1x1xf32, #tpu.memory_space<vmem>>, %arg4: memref<1x1xf32, #tpu.memory_space<vmem>>) attributes {dimension_semantics = [#tpu.dimension_semantics<arbitrary>], iteration_bounds = array<i64: 1>, scalar_prefetch = 0 : i64, scratch_operands = 1 : i64, tpu.core_type = #tpu.core_type<tc>, window_params = [{transform_indices = @transform_0, window_bounds = array<i64: 8, 128>}, {transform_indices = @transform_1, window_bounds = array<i64: 8, 128>}, {pipeline_mode = #tpu.pipeline_mode<synchronous>, transform_indices = @transform_2, window_bounds = array<i64: 1, 1>}]} {
    %c0 = arith.constant 0 : index
    %c0_0 = arith.constant 0 : index
    %0 = vector.load %arg1[%c0, %c0_0] : memref<8x128xf32, #tpu.memory_space<vmem>>, vector<8x128xf32>
    %c0_1 = arith.constant 0 : index
    %c0_2 = arith.constant 0 : index
    %1 = vector.load %arg2[%c0_1, %c0_2] : memref<8x128xf32, #tpu.memory_space<vmem>>, vector<8x128xf32>
    %2 = arith.subf %0, %1 : vector<8x128xf32>
    %3 = math.absf %2 : vector<8x128xf32>
    %4 = vector.shape_cast %3 : vector<8x128xf32> to vector<1x8x128xf32>
    %cst = arith.constant dense<0xFF800000> : vector<1xf32>
    %5 = vector.multi_reduction <maximumf>, %4, %cst [1, 2] : vector<1x8x128xf32> to vector<1xf32>
    %6 = vector.shape_cast %5 : vector<1xf32> to vector<1x1x1xf32>
    %7 = vector.extract %6[0, 0, 0] : f32 from vector<1x1x1xf32>
    %c0_i32 = arith.constant 0 : i32
    %8 = arith.cmpi eq, %arg0, %c0_i32 : i32
    %9 = arith.extui %8 : i1 to i32
    %c0_i32_3 = arith.constant 0 : i32
    %10 = arith.cmpi ne, %9, %c0_i32_3 : i32
    scf.if %10 {
      %cst_10 = arith.constant 0.000000e+00 : f32
      %18 = vector.broadcast %cst_10 : f32 to vector<1x1xf32>
      %c0_11 = arith.constant 0 : index
      %c0_12 = arith.constant 0 : index
      %19 = vector.load %arg4[%c0_11, %c0_12] : memref<1x1xf32, #tpu.memory_space<vmem>>, vector<1x1xf32>
      tpu.vector_store %arg4[%c0_11, %c0_12], %18 {strides = array<i32>} : memref<1x1xf32, #tpu.memory_space<vmem>>, vector<1x1xf32>,
    } else {
    }
    %c0_4 = arith.constant 0 : index
    %c0_5 = arith.constant 0 : index
    %11 = vector.load %arg4[%c0_4, %c0_5] : memref<1x1xf32, #tpu.memory_space<vmem>>, vector<1x1xf32>
    %12 = vector.broadcast %7 : f32 to vector<1x1xf32>
    %13 = arith.maximumf %11, %12 : vector<1x1xf32>
    %c0_6 = arith.constant 0 : index
    %c0_7 = arith.constant 0 : index
    %14 = vector.load %arg4[%c0_6, %c0_7] : memref<1x1xf32, #tpu.memory_space<vmem>>, vector<1x1xf32>
    tpu.vector_store %arg4[%c0_6, %c0_7], %13 {strides = array<i32>} : memref<1x1xf32, #tpu.memory_space<vmem>>, vector<1x1xf32>,
    %c0_i32_8 = arith.constant 0 : i32
    %15 = arith.cmpi eq, %arg0, %c0_i32_8 : i32
    %16 = arith.extui %15 : i1 to i32
    %c0_i32_9 = arith.constant 0 : i32
    %17 = arith.cmpi ne, %16, %c0_i32_9 : i32
    scf.if %17 {
      %c0_10 = arith.constant 0 : index
      %c0_11 = arith.constant 0 : index
      %18 = vector.load %arg4[%c0_10, %c0_11] : memref<1x1xf32, #tpu.memory_space<vmem>>, vector<1x1xf32>
      %c0_12 = arith.constant 0 : index
      %c0_13 = arith.constant 0 : index
      %19 = vector.load %arg3[%c0_12, %c0_13] : memref<1x1xf32, #tpu.memory_space<vmem>>, vector<1x1xf32>
      tpu.vector_store %arg3[%c0_12, %c0_13], %18 {strides = array<i32>} : memref<1x1xf32, #tpu.memory_space<vmem>>, vector<1x1xf32>,
    } else {
    }
    return
  }
  func.func @transform_0(%arg0: i32) -> (i32, i32) {
    %c0_i32 = arith.constant 0 : i32
    %c0_i32_0 = arith.constant 0 : i32
    return %arg0, %c0_i32 : i32, i32
  }
  func.func @transform_1(%arg0: i32) -> (i32, i32) {
    %c0_i32 = arith.constant 0 : i32
    %c0_i32_0 = arith.constant 0 : i32
    return %arg0, %c0_i32 : i32, i32
  }
  func.func @transform_2(%arg0: i32) -> (i32, i32) {
    %c0_i32 = arith.constant 0 : i32
    %c0_i32_0 = arith.constant 0 : i32
    %c0_i32_1 = arith.constant 0 : i32
    return %c0_i32, %c0_i32_0 : i32, i32
  }
}

</mosaic_0001>

<llo_original>
// kernel: tpu_custom_call.1
$region0: #{tpu_custom_call.1}
  #allocation0 [shape = 'u32[]', space=smem, size = 0x4, offset = 0x4, fixed_abs, tag = 'smem constant byte address 0x4 - core index']
  #allocation1 [shape = 'u32[144,128]{1,0:T(1,128)}', space=vmem, size = 0x12000, scoped, tag = 'internal scratch']
  #allocation2 [shape = 'f32[1,1]{1,0:T(1,128)}', space=vmem, size = 0x200, scoped, tag = 'scratch operand']
  %s0 = inlined_call_operand.hbm [shape: f32[8,128], index: 0, kind: input, shape index: {}]
  %s1 = inlined_call_operand.hbm [shape: f32[8,128], index: 1, kind: input, shape index: {}]
  %s2 = inlined_call_operand.hbm [shape: f32[1,1], index: 2, kind: output, shape index: {}]
  %s3 = sld [smem:[#allocation0]]
  $region34: #{tpu_custom_call.1} parent=0
    _
  %s5 = ssub.s32 1, %s3
  %s6 = scalar_select 0, %s5, %s3
  $region1: #{tpu_custom_call.1} parent=0
    #allocation3 [shape = 'u8[4096]{0}', space=vmem, size = 0x1000, scoped, tag = 'input window, operand 0, single buffered']
    #allocation4 [shape = 's32[1]{0}', space=sflag, size = 0x4, scoped, tag = 'scoped memory for tpu_custom_call.1']
    #allocation5 [shape = 's32[1]{0}', space=sflag, size = 0x4, scoped, tag = 'scoped memory for tpu_custom_call.1']
    #allocation6 [shape = 'u8[4096]{0}', space=vmem, size = 0x1000, scoped, tag = 'input window, operand 1, single buffered']
    #allocation7 [shape = 's32[1]{0}', space=sflag, size = 0x4, scoped, tag = 'scoped memory for tpu_custom_call.1']
    #allocation8 [shape = 'u8[512]{0}', space=vmem, size = 0x400, scoped, tag = 'output window, operand 0, single buffered']
    %7 = vsyncpa [#allocation4], 0
    %8 = vsyncpa [#allocation7], 0
    %9 = vsyncpa [#allocation5], 0
    // Predicated region
    $region2: #{tpu_custom_call.1} parent=1 // pred_check
      _
    $region3: #{tpu_custom_call.1} parent=1 // pred_check_branch
      %11 = sbr.rel (0) target = $region5
    $region4: #{tpu_custom_call.1} parent=1 // pred_region
      %s13 = ssub.s32 128, 128
      %14 = vsyncadd [#allocation4], %s13
      %s16 = sshll.u32 [#allocation3], 4
      %s17 = int_to_ptr.vmem [resolvable:$true] %s16
      %19 = dma.hbm_to_vmem [thread:$0]  %s0, 128, %s17, [#allocation4]
    $region5: #{tpu_custom_call.1} parent=1 // pred_fallthru
      _
    // Predicated region
    $region6: #{tpu_custom_call.1} parent=1 // pred_check
      _
    $region7: #{tpu_custom_call.1} parent=1 // pred_check_branch
      %21 = sbr.rel (0) target = $region9
    $region8: #{tpu_custom_call.1} parent=1 // pred_region
      %s23 = ssub.s32 128, 128
      %24 = vsyncadd [#allocation7], %s23
      %s26 = sshll.u32 [#allocation6], 4
      %s27 = int_to_ptr.vmem [resolvable:$true] %s26
      %29 = dma.hbm_to_vmem [thread:$0]  %s1, 128, %s27, [#allocation7]
    $region9: #{tpu_custom_call.1} parent=1 // pred_fallthru
      _
    // Predicated region
    $region10: #{tpu_custom_call.1} parent=1 // pred_check
      _
    $region11: #{tpu_custom_call.1} parent=1 // pred_check_branch
      %31 = sbr.rel (0) target = $region13
    $region12: #{tpu_custom_call.1} parent=1 // pred_region
      %32 = dma.done [#allocation4], 128
    $region13: #{tpu_custom_call.1} parent=1 // pred_fallthru
      _
    // Predicated region
    $region14: #{tpu_custom_call.1} parent=1 // pred_check
      _
    $region15: #{tpu_custom_call.1} parent=1 // pred_check_branch
      %34 = sbr.rel (0) target = $region17
    $region16: #{tpu_custom_call.1} parent=1 // pred_region
      %35 = dma.done [#allocation7], 128
    $region17: #{tpu_custom_call.1} parent=1 // pred_fallthru
      _
    %v36 = vld [vmem:[#allocation3] sm:$0xff]
    %v37 = vld [vmem:[#allocation6] sm:$0xff]
    %v38 = vsub.f32 %v36, %v37
    %v39 = vand.u32 2147483647, %v38
    %40 = vmax.xlane.f32.xlu0 %v39
    %v41 = vpop.xlane.xlu0 %40
    %v42 = vrot.slane %v41, 4
    %v43 = vmax.f32 %v41, %v42
    %v44 = vrot.slane %v43, 2
    %v45 = vmax.f32 %v43, %v44
    %v46 = vrot.slane %v45, 1
    %v47 = vmax.f32 %v45, %v46
    %s48 = vtos %v47
    %p49 = scmp.eq.s32.totalorder 0, 0
    // Predicated region
    $region18: #{tpu_custom_call.1} parent=1 // pred_check
      %p50 = pneg %p49
    $region19: #{tpu_custom_call.1} parent=1 // pred_check_branch
      %52 = sbr.rel (%p50) target = $region21
    $region20: #{tpu_custom_call.1} parent=1 // pred_region
      %vm53 = vcmask 0
      %54 = vst.msk [vmem:[#allocation2] sm:$0x1] %vm53, 0.0
    $region21: #{tpu_custom_call.1} parent=1 // pred_fallthru
      _
    %v55 = vld [vmem:[#allocation2] sm:$0x1]
    %v56 = vstv %s48
    %v57 = vmax.f32 %v55, %v56
    %vm58 = vcmask 0
    %59 = vst.msk [vmem:[#allocation2] sm:$0x1] %vm58, %v57
    // Predicated region
    $region22: #{tpu_custom_call.1} parent=1 // pred_check
      %p60 = pneg %p49
    $region23: #{tpu_custom_call.1} parent=1 // pred_check_branch
      %62 = sbr.rel (%p60) target = $region25
    $region24: #{tpu_custom_call.1} parent=1 // pred_region
      %v63 = vld [vmem:[#allocation2] sm:$0x1]
      %64 = vst.msk [vmem:[#allocation8] sm:$0x1] %vm58, %v63
    $region25: #{tpu_custom_call.1} parent=1 // pred_fallthru
      _
    // Predicated region
    $region26: #{tpu_custom_call.1} parent=1 // pred_check
      _
    $region27: #{tpu_custom_call.1} parent=1 // pred_check_branch
      %66 = sbr.rel (0) target = $region29
    $region28: #{tpu_custom_call.1} parent=1 // pred_region
      %s68 = ssub.s32 16, 16
      %69 = vsyncadd [#allocation5], %s68
      %s71 = sshll.u32 [#allocation8], 4
      %s72 = int_to_ptr.vmem [resolvable:$true] %s71
      %74 = dma.vmem_to_hbm [thread:$0]  %s72, 16, %s2, [#allocation5]
    $region29: #{tpu_custom_call.1} parent=1 // pred_fallthru
      _
    // Predicated region
    $region30: #{tpu_custom_call.1} parent=1 // pred_check
      _
    $region31: #{tpu_custom_call.1} parent=1 // pred_check_branch
      %76 = sbr.rel (0) target = $region33
    $region32: #{tpu_custom_call.1} parent=1 // pred_region
      %77 = dma.done [#allocation5], 16
    $region33: #{tpu_custom_call.1} parent=1 // pred_fallthru
      _
    %78 = vsyncpa [#allocation4], 1
    %79 = vsyncpa [#allocation7], 1
    %80 = vsyncpa [#allocation5], 1

</llo_original>
